<compile_context>
chip_gen: v7x
topology: tpu7x:2x2x1
jax: 0.10.0
libtpu: 0.0.40
codegen_flags: <defaults>
</compile_context>

<pallas_src>
import functools
import math

import jax
import jax.numpy as jnp
from jax.experimental import pallas as pl
from jax.experimental.pallas import tpu as pltpu


def _tv_kernel(x_ref, h_ref, w_ref, prev_ref, *, H, W, L, LC, BC, TB, NC, MASK_ROWS):
    """One (TB, LC) block: TB flattened (batch*channel) slices x one spatial chunk."""
    bi = pl.program_id(0)
    x = x_ref[...]                                   # (TB, LC), input dtype (roll natively)
    xf = x.astype(jnp.float32)

    # Column (lane) masks built once on a (1, LC) row, broadcast across TB sublanes.
    col = jax.lax.broadcasted_iota(jnp.int32, (1, LC), 1)

    if NC == 1:
        valid_cols = LC                              # static: chunk == whole slice
    else:
        ci = pl.program_id(1)
        valid_cols = jnp.minimum(LC, L - ci * LC)    # last chunk may be partial

    if MASK_ROWS:
        row = jax.lax.broadcasted_iota(jnp.int32, (TB, 1), 0)
        row_valid = (row + bi * TB) < BC             # (TB, 1): mask garbage tail rows

    def _reduce(sq):                                 # (TB, *) -> scalar, tail rows masked
        if MASK_ROWS:
            rows = jnp.sum(sq, axis=1, keepdims=True)
            return jnp.sum(jnp.where(row_valid, rows, 0.0))
        return jnp.sum(sq)

    # ---- vertical (height) neighbours inside the chunk: flat p vs p + W ----
    x_down = pltpu.roll(x, shift=LC - W, axis=1)     # value at p+W brought to p (XLU)
    dh = jnp.where(col < valid_cols - W, x_down.astype(jnp.float32) - xf, 0.0)
    h_part = _reduce(dh * dh)

    # ---- vertical seam between this chunk and the previous one ----
    if NC > 1:
        ci = pl.program_id(1)
        # prev_ref holds the last image row of chunk ci-1 (garbage at ci == 0,
        # but that contribution is select-ed away below).
        d_seam = x[:, :W].astype(jnp.float32) - prev_ref[...].astype(jnp.float32)
        seam = _reduce(d_seam * d_seam)
        h_part = h_part + jnp.where(ci > 0, seam, 0.0)
        # Carry this chunk's last image row for the next chunk's seam.
        prev_ref[...] = x[:, LC - W:]

    h_ref[0, 0] = h_part

    # ---- horizontal (width) neighbours: flat p vs p + 1, masked at row ends ----
    x_right = pltpu.roll(x, shift=LC - 1, axis=1)
    if NC == 1:
        mask_w = (col % W) != (W - 1)
    else:
        mask_w = jnp.logical_and((col % W) != (W - 1), col < valid_cols)
    dw = jnp.where(mask_w, x_right.astype(jnp.float32) - xf, 0.0)
    w_ref[0, 0] = _reduce(dw * dw)


def _round_up(a, m):
    return ((a + m - 1) // m) * m


def tv_loss(x, tv_loss_weight: float = 1.0, *, max_block_elems: int = 512 * 1024):
    """Total-variation loss matching TVLoss.forward. x: (B, C, H, W)."""
    B, C, H, W = x.shape
    BC = B * C
    L = H * W
    xr = x.reshape(BC, L)                            # metadata-only, lane-dense slices

    max_tb = _round_up(BC, 8)

    if 8 * L <= max_block_elems:
        # Small/medium slices: one chunk per slice, many slices per block.
        lc, nc = L, 1
        tb = max(8, (max_block_elems // L) // 8 * 8)
        tb = min(tb, max_tb)
        if BC > 8:
            # Keep >= 2 blocks so both TensorCores get work on megacore parts.
            tb = min(tb, max(8, _round_up(pl.cdiv(BC, 2), 8)))
    else:
        # Large slices: tile the flattened spatial axis into chunks of whole
        # image rows; the vertical seam is carried via VMEM scratch.
        tb = min(8, max_tb)
        base = 128 // math.gcd(W, 128)               # rows so that R*W % 128 == 0
        rows_budget = max(1, max_block_elems // (8 * W))
        r = max(base, (rows_budget // base) * base)
        if r >= H:
            lc, nc = L, 1
        else:
            lc, nc = r * W, pl.cdiv(H, r)
        # TODO(synk): if W alone is so large that even (8, base*W) overflows
        # VMEM, a third tiling level along W (with a horizontal seam) is needed.

    nb = pl.cdiv(BC, tb)
    mask_rows = (nb * tb) != BC

    kernel = functools.partial(
        _tv_kernel, H=H, W=W, L=L, LC=lc, BC=BC, TB=tb, NC=nc, MASK_ROWS=mask_rows)

    # VMEM budget from the actual buffers (2x double-buffered input + f32 temps).
    in_block = tb * lc * x.dtype.itemsize
    f32_block = tb * lc * 4
    vmem_limit = int(min(64 << 20, max(24 << 20, 2 * in_block + 6 * f32_block + (1 << 20))))

    h_parts, w_parts = pl.pallas_call(
        kernel,
        out_shape=(
            jax.ShapeDtypeStruct((nb, nc), jnp.float32),
            jax.ShapeDtypeStruct((nb, nc), jnp.float32),
        ),
        grid_spec=pltpu.PrefetchScalarGridSpec(
            num_scalar_prefetch=0,
            grid=(nb, nc),
            in_specs=[pl.BlockSpec((tb, lc), lambda bi, ci: (bi, ci))],
            out_specs=(
                pl.BlockSpec((1, 1), lambda bi, ci: (bi, ci), memory_space=pltpu.SMEM),
                pl.BlockSpec((1, 1), lambda bi, ci: (bi, ci), memory_space=pltpu.SMEM),
            ),
            scratch_shapes=[pltpu.VMEM((tb, W), x.dtype)],   # seam carry (last image row)
        ),
        compiler_params=pltpu.CompilerParams(
            # Batch*channel blocks are independent -> parallel (megacore);
            # the spatial-chunk axis carries the seam scratch -> arbitrary.
            dimension_semantics=("parallel", "arbitrary"),
            vmem_limit_bytes=vmem_limit,
        ),
    )(xr)

    h_tv = jnp.sum(h_parts)
    w_tv = jnp.sum(w_parts)
    count_h = C * (H - 1) * W
    count_w = C * H * (W - 1)
    return tv_loss_weight * 2.0 * (h_tv / count_h + w_tv / count_w) / B


def tv_loss_ref(x, tv_loss_weight: float = 1.0):
    # Pure-JAX reference mirroring the PyTorch module.
    B, C, H, W = x.shape
    count_h = C * (H - 1) * W
    count_w = C * H * (W - 1)
    h_tv = jnp.sum((x[:, :, 1:, :] - x[:, :, : H - 1, :]) ** 2)
    w_tv = jnp.sum((x[:, :, :, 1:] - x[:, :, :, : W - 1]) ** 2)
    return tv_loss_weight * 2.0 * (h_tv / count_h + w_tv / count_w) / B


if __name__ == "__main__":
    key = jax.random.PRNGKey(0)
    k1, k2, k3, k4 = jax.random.split(key, 4)

    # 1) Baseline small case (single chunk, no tail masking).
    x1 = jax.random.normal(k1, (2, 4, 16, 16), dtype=jnp.float32)
    out1 = jax.block_until_ready(tv_loss(x1, tv_loss_weight=1.0))
    ref1 = tv_loss_ref(x1)
    assert jnp.allclose(out1, ref1, rtol=1e-5, atol=1e-5), (out1, ref1)

    # 2) Forced spatial chunking: seam carry + partial last chunk + tail rows.
    x2 = jax.random.normal(k2, (2, 3, 21, 128), dtype=jnp.float32)
    out2 = jax.block_until_ready(tv_loss(x2, max_block_elems=4096))
    ref2 = tv_loss_ref(x2)
    assert jnp.allclose(out2, ref2, rtol=1e-5, atol=1e-5), (out2, ref2)

    # 3) Batch*channel not a multiple of the block rows (tail-row masking, odd W).
    x3 = jax.random.normal(k3, (3, 5, 16, 24), dtype=jnp.float32)
    out3 = jax.block_until_ready(tv_loss(x3))
    ref3 = tv_loss_ref(x3)
    assert jnp.allclose(out3, ref3, rtol=1e-5, atol=1e-5), (out3, ref3)

    # 4) bf16 input: roll in bf16, accumulate squares in f32.
    x4 = jax.random.normal(k4, (2, 4, 16, 16), dtype=jnp.bfloat16)
    out4 = jax.block_until_ready(tv_loss(x4))
    ref4 = tv_loss_ref(x4.astype(jnp.float32))
    assert jnp.allclose(out4, ref4, rtol=5e-2, atol=5e-2), (out4, ref4)

    print("KERNEL_OK")
</pallas_src>

<mosaic_0001>
module attributes {stable_mosaic.version = 11 : i64} {
  func.func @_tv_kernel(%arg0: i32, %arg1: i32, %arg2: memref<8x256xf32, #tpu.memory_space<vmem>>, %arg3: memref<1x1xf32, #tpu.memory_space<smem>>, %arg4: memref<1x1xf32, #tpu.memory_space<smem>>, %arg5: memref<8x16xf32, #tpu.memory_space<vmem>>) attributes {dimension_semantics = [#tpu.dimension_semantics<parallel>, #tpu.dimension_semantics<arbitrary>], iteration_bounds = array<i64: 1, 1>, scalar_prefetch = 0 : i64, scratch_operands = 1 : i64, tpu.core_type = #tpu.core_type<tc>, window_params = [{transform_indices = @transform_0, window_bounds = array<i64: 8, 256>}, {transform_indices = @transform_1, window_bounds = array<i64: 1, 1>}, {transform_indices = @transform_2, window_bounds = array<i64: 1, 1>}]} {
    %c0 = arith.constant 0 : index
    %c0_0 = arith.constant 0 : index
    %0 = vector.load %arg2[%c0, %c0_0] : memref<8x256xf32, #tpu.memory_space<vmem>>, vector<8x256xf32>
    %1 = tpu.iota {dimensions = array<i32: 1>} : vector<1x256xi32>
    %c240_i32 = arith.constant 240 : i32
    %2 = tpu.dynamic_rotate %0 by %c240_i32 dim 1 : vector<8x256xf32>, i32 -> vector<8x256xf32>
    %c240_i32_1 = arith.constant 240 : i32
    %3 = vector.broadcast %c240_i32_1 : i32 to vector<1x256xi32>
    %4 = arith.cmpi slt, %1, %3 : vector<1x256xi32>
    %5 = arith.subf %2, %0 : vector<8x256xf32>
    %cst = arith.constant 0.000000e+00 : f32
    %6 = vector.shape_cast %4 : vector<1x256xi1> to vector<1x256xi1>
    %7 = vector.broadcast %6 : vector<1x256xi1> to vector<8x256xi1>
    %8 = vector.broadcast %cst : f32 to vector<8x256xf32>
    %9 = arith.select %7, %5, %8 : vector<8x256xi1>, vector<8x256xf32>
    %10 = arith.mulf %9, %9 : vector<8x256xf32>
    %11 = vector.shape_cast %10 : vector<8x256xf32> to vector<1x8x256xf32>
    %cst_2 = arith.constant dense<0.000000e+00> : vector<1xf32>
    %12 = vector.multi_reduction <add>, %11, %cst_2 [1, 2] : vector<1x8x256xf32> to vector<1xf32>
    %13 = vector.shape_cast %12 : vector<1xf32> to vector<1x1x1xf32>
    %14 = vector.extract %13[0, 0, 0] : f32 from vector<1x1x1xf32>
    %c0_3 = arith.constant 0 : index
    %c0_4 = arith.constant 0 : index
    %15 = memref.load %arg3[%c0_3, %c0_4] : memref<1x1xf32, #tpu.memory_space<smem>>
    memref.store %14, %arg3[%c0_3, %c0_4] : memref<1x1xf32, #tpu.memory_space<smem>>
    %c255_i32 = arith.constant 255 : i32
    %16 = tpu.dynamic_rotate %0 by %c255_i32 dim 1 : vector<8x256xf32>, i32 -> vector<8x256xf32>
    %c16_i32 = arith.constant 16 : i32
    %c0_i32 = arith.constant 0 : i32
    %17 = arith.cmpi eq, %c16_i32, %c0_i32 : i32
    %c1_i32 = arith.constant 1 : i32
    %18 = arith.select %17, %c1_i32, %c16_i32 : i32
    %19 = vector.broadcast %18 : i32 to vector<1x256xi32>
    %20 = arith.remsi %1, %19 : vector<1x256xi32>
    %c0_i32_5 = arith.constant 0 : i32
    %21 = vector.broadcast %c0_i32_5 : i32 to vector<1x256xi32>
    %22 = arith.cmpi ne, %20, %21 : vector<1x256xi32>
    %c0_i32_6 = arith.constant 0 : i32
    %23 = vector.broadcast %c0_i32_6 : i32 to vector<1x256xi32>
    %24 = arith.cmpi slt, %20, %23 : vector<1x256xi32>
    %c0_i32_7 = arith.constant 0 : i32
    %25 = arith.cmpi slt, %18, %c0_i32_7 : i32
    %26 = vector.broadcast %25 : i1 to vector<1x256xi1>
    %27 = vector.broadcast %26 : vector<1x256xi1> to vector<1x256xi1>
    %28 = arith.xori %24, %27 : vector<1x256xi1>
    %29 = arith.andi %28, %22 : vector<1x256xi1>
    %30 = vector.broadcast %18 : i32 to vector<1x256xi32>
    %31 = arith.addi %20, %30 : vector<1x256xi32>
    %32 = arith.select %29, %31, %20 : vector<1x256xi1>, vector<1x256xi32>
    %c15_i32 = arith.constant 15 : i32
    %33 = vector.broadcast %c15_i32 : i32 to vector<1x256xi32>
    %34 = arith.cmpi ne, %32, %33 : vector<1x256xi32>
    %35 = arith.subf %16, %0 : vector<8x256xf32>
    %cst_8 = arith.constant 0.000000e+00 : f32
    %36 = vector.shape_cast %34 : vector<1x256xi1> to vector<1x256xi1>
    %37 = vector.broadcast %36 : vector<1x256xi1> to vector<8x256xi1>
    %38 = vector.broadcast %cst_8 : f32 to vector<8x256xf32>
    %39 = arith.select %37, %35, %38 : vector<8x256xi1>, vector<8x256xf32>
    %40 = arith.mulf %39, %39 : vector<8x256xf32>
    %41 = vector.shape_cast %40 : vector<8x256xf32> to vector<1x8x256xf32>
    %cst_9 = arith.constant dense<0.000000e+00> : vector<1xf32>
    %42 = vector.multi_reduction <add>, %41, %cst_9 [1, 2] : vector<1x8x256xf32> to vector<1xf32>
    %43 = vector.shape_cast %42 : vector<1xf32> to vector<1x1x1xf32>
    %44 = vector.extract %43[0, 0, 0] : f32 from vector<1x1x1xf32>
    %c0_10 = arith.constant 0 : index
    %c0_11 = arith.constant 0 : index
    %45 = memref.load %arg4[%c0_10, %c0_11] : memref<1x1xf32, #tpu.memory_space<smem>>
    memref.store %44, %arg4[%c0_10, %c0_11] : memref<1x1xf32, #tpu.memory_space<smem>>
    return
  }
  func.func @transform_0(%arg0: i32, %arg1: i32) -> (i32, i32) {
    %c0_i32 = arith.constant 0 : i32
    return %arg0, %arg1 : i32, i32
  }
  func.func @transform_1(%arg0: i32, %arg1: i32) -> (i32, i32) {
    %c0_i32 = arith.constant 0 : i32
    return %arg0, %arg1 : i32, i32
  }
  func.func @transform_2(%arg0: i32, %arg1: i32) -> (i32, i32) {
    %c0_i32 = arith.constant 0 : i32
    return %arg0, %arg1 : i32, i32
  }
}

</mosaic_0001>

<llo_original>
// kernel: tpu_custom_call.1
$region0: #{tpu_custom_call.1}
  #allocation0 [shape = 'u32[]', space=smem, size = 0x4, offset = 0x4, fixed_abs, tag = 'smem constant byte address 0x4 - core index']
  #allocation1 [shape = 'u32[144,128]{1,0:T(1,128)}', space=vmem, size = 0x12000, scoped, tag = 'internal scratch']
  #allocation2 [shape = 'f32[8,16]{1,0:T(8,128)}', space=vmem, size = 0x1000, scoped, tag = 'scratch operand']
  %s0 = inlined_call_operand.hbm [shape: f32[8,256], index: 0, kind: input, shape index: {}]
  %s1 = inlined_call_operand.hbm [shape: f32[1,1], index: 1, kind: output, shape index: {0}]
  %s2 = inlined_call_operand.hbm [shape: f32[1,1], index: 2, kind: output, shape index: {1}]
  %3 = xla_tuple %s1, %s2
  %s4 = sld [smem:[#allocation0]]
  $region26: #{tpu_custom_call.1} parent=0
    _
  %s6 = ssub.s32 1, %s4
  %s7 = scalar_select 0, %s6, %s4
  $region1: #{tpu_custom_call.1} parent=0
    #allocation3 [shape = 'u8[8192]{0}', space=vmem, size = 0x2000, scoped, tag = 'input window, operand 0, single buffered']
    #allocation4 [shape = 's32[1]{0}', space=sflag, size = 0x4, scoped, tag = 'scoped memory for tpu_custom_call.1']
    #allocation5 [shape = 's32[1]{0}', space=sflag, size = 0x4, scoped, tag = 'scoped memory for tpu_custom_call.1']
    #allocation6 [shape = 'u8[512]{0}', space=smem, size = 0x200, scoped, tag = 'output window, operand 0, single buffered']
    #allocation7 [shape = 'u8[512]{0}', space=smem, size = 0x200, scoped, tag = 'output window, operand 1, single buffered']
    #allocation8 [shape = 's32[1]{0}', space=sflag, size = 0x4, scoped, tag = 'scoped memory for tpu_custom_call.1']
    %8 = vsyncpa [#allocation4], 0
    %9 = vsyncpa [#allocation5], 0
    %10 = vsyncpa [#allocation8], 0
    // Predicated region
    $region2: #{tpu_custom_call.1} parent=1 // pred_check
      _
    $region3: #{tpu_custom_call.1} parent=1 // pred_check_branch
      %12 = sbr.rel (0) target = $region5
    $region4: #{tpu_custom_call.1} parent=1 // pred_region
      %s14 = ssub.s32 256, 256
      %15 = vsyncadd [#allocation4], %s14
      %s17 = sshll.u32 [#allocation3], 4
      %s18 = int_to_ptr.vmem [resolvable:$true] %s17
      %20 = dma.hbm_to_vmem [thread:$0]  %s0, 256, %s18, [#allocation4]
    $region5: #{tpu_custom_call.1} parent=1 // pred_fallthru
      _
    // Predicated region
    $region6: #{tpu_custom_call.1} parent=1 // pred_check
      _
    $region7: #{tpu_custom_call.1} parent=1 // pred_check_branch
      %22 = sbr.rel (0) target = $region9
    $region8: #{tpu_custom_call.1} parent=1 // pred_region
      %23 = dma.done [#allocation4], 256
    $region9: #{tpu_custom_call.1} parent=1 // pred_fallthru
      _
    %v24 = vld [vmem:[#allocation3] sm:$0xff]
    %v25 = vld [vmem:[#allocation3 + $0x8] sm:$0xff]
    %v26 = vlaneseq
    %v27 = vand.u32 %v26, 127
    %v28 = vadd.s32 %v27, 128
    %29 = vrot.lane.b32.xlu0 %v24, 112
    %v30 = vpop.permute.xlu0 %29
    %31 = vrot.lane.b32.xlu0 %v25, 112
    %v32 = vpop.permute.xlu0 %31
    %vm33 = vcmp.lt.s32.totalorder %v27, 112
    %v34 = vsel %vm33, %v30, %v32
    %v35 = vsel %vm33, %v32, %v30
    %vm36 = vcmp.lt.s32.totalorder %v27, 240
    %vm37 = vcmp.lt.s32.totalorder %v28, 240
    %v38 = vsub.f32 %v34, %v24
    %v39 = vsub.f32 %v35, %v25
    %v40 = vsel %vm36, 1, 0
    %v41 = vsel %vm37, 1, 0
    %vm42 = vcmp.eq.s32.totalorder %v40, 1
    %vm43 = vcmp.eq.s32.totalorder %v41, 1
    %v44 = vsel %vm42, %v38, 0.0
    %v45 = vsel %vm43, %v39, 0.0
    %v46 = vmul.f32 %v44, %v44
    %v47 = vmul.f32 %v45, %v45
    %v48 = vadd.f32 %v46, %v47
    %49 = vadd.xlane.f32.xlu0 %v48
    %v50 = vpop.xlane.xlu0 %49
    %v51 = vrot.slane %v50, 4
    %v52 = vadd.f32 %v50, %v51
    %v53 = vrot.slane %v52, 2
    %v54 = vadd.f32 %v52, %v53
    %v55 = vrot.slane %v54, 1
    %v56 = vadd.f32 %v54, %v55
    %s57 = vtos %v56
    %s58 = scalar_lea.smem [#allocation6], 0
    %59 = sst [smem:[%s58]] %s57
    %60 = vrot.lane.b32.xlu0 %v24, 127
    %v61 = vpop.permute.xlu0 %60
    %62 = vrot.lane.b32.xlu0 %v25, 127
    %v63 = vpop.permute.xlu0 %62
    %vm64 = vcmp.lt.s32.totalorder %v27, 127
    %v65 = vsel %vm64, %v61, %v63
    %v66 = vsel %vm64, %v63, %v61
    %vm67 = vcmp.lt.s32.totalorder %v27, 0
    %v68 = vsub.s32 0, %v27
    %v69 = vsel %vm67, %v68, %v27
    %v70 = vshrl.u32 %v69, 4
    %v71 = vand.u32 %v69, 15
    %v72 = vsub.s32 0, %v71
    %v73 = vsel %vm67, %v72, %v71
    %vm74 = vcmp.lt.s32.totalorder %v28, 0
    %v75 = vsub.s32 0, %v28
    %v76 = vsel %vm74, %v75, %v28
    %v77 = vshrl.u32 %v76, 4
    %v78 = vand.u32 %v76, 15
    %v79 = vsub.s32 0, %v78
    %v80 = vsel %vm74, %v79, %v78
    %vm81 = vcmp.ne.s32.totalorder %v73, 0
    %vm82 = vcmp.ne.s32.totalorder %v80, 0
    %vm83 = vcmp.lt.s32.totalorder %v73, 0
    %vm84 = vcmp.lt.s32.totalorder %v80, 0
    %vm85 = vmand %vm83, %vm81
    %vm86 = vmand %vm84, %vm82
    %v87 = vadd.s32 %v73, 16
    %v88 = vadd.s32 %v80, 16
    %v89 = vsel %vm85, %v87, %v73
    %v90 = vsel %vm86, %v88, %v80
    %vm91 = vcmp.ne.s32.totalorder %v89, 15
    %vm92 = vcmp.ne.s32.totalorder %v90, 15
    %v93 = vsub.f32 %v65, %v24
    %v94 = vsub.f32 %v66, %v25
    %v95 = vsel %vm91, 1, 0
    %v96 = vsel %vm92, 1, 0
    %vm97 = vcmp.eq.s32.totalorder %v95, 1
    %vm98 = vcmp.eq.s32.totalorder %v96, 1
    %v99 = vsel %vm97, %v93, 0.0
    %v100 = vsel %vm98, %v94, 0.0
    %v101 = vmul.f32 %v99, %v99
    %v102 = vmul.f32 %v100, %v100
    %v103 = vadd.f32 %v101, %v102
    %104 = vadd.xlane.f32.xlu0 %v103
    %v105 = vpop.xlane.xlu0 %104
    %v106 = vrot.slane %v105, 4
    %v107 = vadd.f32 %v105, %v106
    %v108 = vrot.slane %v107, 2
    %v109 = vadd.f32 %v107, %v108
    %v110 = vrot.slane %v109, 1
    %v111 = vadd.f32 %v109, %v110
    %s112 = vtos %v111
    %s113 = scalar_lea.smem [#allocation7], 0
    %114 = sst [smem:[%s113]] %s112
    // Predicated region
    $region10: #{tpu_custom_call.1} parent=1 // pred_check
      _
    $region11: #{tpu_custom_call.1} parent=1 // pred_check_branch
      %116 = sbr.rel (0) target = $region13
    $region12: #{tpu_custom_call.1} parent=1 // pred_region
      %s118 = ssub.s32 16, 16
      %119 = vsyncadd [#allocation5], %s118
      %122 = dma.smem_to_hbm [#allocation6], 16, %s1, [#allocation5]
    $region13: #{tpu_custom_call.1} parent=1 // pred_fallthru
      _
    // Predicated region
    $region14: #{tpu_custom_call.1} parent=1 // pred_check
      _
    $region15: #{tpu_custom_call.1} parent=1 // pred_check_branch
      %124 = sbr.rel (0) target = $region17
    $region16: #{tpu_custom_call.1} parent=1 // pred_region
      %s126 = ssub.s32 16, 16
      %127 = vsyncadd [#allocation8], %s126
      %130 = dma.smem_to_hbm [#allocation7], 16, %s2, [#allocation8]
    $region17: #{tpu_custom_call.1} parent=1 // pred_fallthru
      _
    // Predicated region
    $region18: #{tpu_custom_call.1} parent=1 // pred_check
      _
    $region19: #{tpu_custom_call.1} parent=1 // pred_check_branch
      %132 = sbr.rel (0) target = $region21
    $region20: #{tpu_custom_call.1} parent=1 // pred_region
      %133 = dma.done [#allocation5], 16
    $region21: #{tpu_custom_call.1} parent=1 // pred_fallthru
      _
    // Predicated region
    $region22: #{tpu_custom_call.1} parent=1 // pred_check
      _
    $region23: #{tpu_custom_call.1} parent=1 // pred_check_branch
      %135 = sbr.rel (0) target = $region25
    $region24: #{tpu_custom_call.1} parent=1 // pred_region
      %136 = dma.done [#allocation8], 16
    $region25: #{tpu_custom_call.1} parent=1 // pred_fallthru
      _
    %137 = sfence
    %138 = vsyncpa [#allocation4], 1
    %139 = vsyncpa [#allocation5], 1
    %140 = vsyncpa [#allocation8], 1

</llo_original>
